<compile_context>
chip_gen: v7x
topology: tpu7x:2x2x1
jax: 0.10.0
libtpu: 0.0.40
codegen_flags: <defaults>
</compile_context>

<pallas_src>
import math

import numpy as np
import jax
import jax.numpy as jnp
from jax import lax
from jax.experimental import pallas as pl
from jax.experimental.pallas import tpu as pltpu


# ---------------------------------------------------------------------------
# Host-side construction of the separable interpolation matrices
# ---------------------------------------------------------------------------
def _interp_matrix(n_in, n_out, scale_factor, mode):
    """(n_out, n_in) interpolation matrix matching
    torch.nn.functional.interpolate(scale_factor=s, align_corners=False)."""
    inv_scale = 1.0 / float(scale_factor)      # torch passes 1/s to the backend
    m = np.zeros((n_out, n_in), np.float32)
    rows = np.arange(n_out)
    if mode == "nearest":
        # NOTE: matches PyTorch's legacy 'nearest' (floor(dst/scale)),
        # NOT 'nearest-exact'.
        src = np.floor(rows * inv_scale).astype(np.int64)
        src = np.clip(src, 0, n_in - 1)
        m[rows, src] = 1.0
        return m
    if mode not in ("bilinear", "linear"):
        raise NotImplementedError(f"mode {mode!r} not supported")
    # bilinear, align_corners=False (half-pixel centers, clamp negative src)
    src = (rows.astype(np.float64) + 0.5) * inv_scale - 0.5
    src = np.maximum(src, 0.0)
    i0 = np.minimum(np.floor(src).astype(np.int64), n_in - 1)
    i1 = np.minimum(i0 + 1, n_in - 1)
    frac = (src - i0).astype(np.float32)
    np.add.at(m, (rows, i0), 1.0 - frac)
    np.add.at(m, (rows, i1), frac)
    return m


# ---------------------------------------------------------------------------
# Pallas kernel
# ---------------------------------------------------------------------------
def _resize_kernel(x_ref, ah_ref, awt_ref, o_ref, t_ref):
    # x_ref:   (tn, H_in,  W_in)   input planes (compute dtype)
    # ah_ref:  (H_out, H_in)       row-interpolation matrix
    # awt_ref: (W_in,  W_out)      column-interpolation matrix, transposed
    # o_ref:   (tn, H_out, W_out)
    # t_ref:   (tn, H_in,  W_out)  VMEM scratch (W-pass intermediate)
    tn, h_in, w_in = x_ref.shape
    w_out = awt_ref.shape[1]

    # --- W-pass: ONE big MXU matmul over all planes in the block -----------
    #   (tn*H_in, W_in) @ (W_in, W_out) -> (tn*H_in, W_out), f32 accumulate.
    t_ref[...] = (
        jnp.dot(x_ref[...].reshape(tn * h_in, w_in), awt_ref[...],
                preferred_element_type=jnp.float32)
        .reshape(tn, h_in, w_out)
        .astype(t_ref.dtype)
    )

    ah = ah_ref[...]                       # hoisted: loaded once per grid step

    # --- H-pass: per-plane matmul via fori_loop (bounded live ranges) ------
    def h_pass(i, carry):
        o_ref[i] = jnp.dot(ah, t_ref[i],
                           preferred_element_type=jnp.float32
                           ).astype(o_ref.dtype)
        return carry

    lax.fori_loop(0, tn, h_pass, 0, unroll=(True if tn <= 16 else 8))


# ---------------------------------------------------------------------------
# Block-size picker (generation-aware)
# ---------------------------------------------------------------------------
def _pick_images_per_block(n, h_in, w_in, h_out, w_out, itemsize):
    try:
        vmem_cap = int(pltpu.get_tpu_info().vmem_capacity_bytes)
    except Exception:
        vmem_cap = 64 << 20                       # conservative (v7x per-TC)
    # ~1/3 of physical VMEM for the pipelined working set, capped at 32 MiB.
    budget = min(vmem_cap // 3, 32 << 20)
    per_img = (2 * itemsize * (h_in * w_in + h_out * w_out)   # 2x-buffered in+out
               + itemsize * h_in * w_out)                      # resident scratch
    tn = max(1, int(budget // per_img))
    tn = min(tn, 128)                             # keep the kernel code bounded
    if n >= 4:
        tn = min(tn, max(1, n // 4))              # >=4 grid steps: both v7x TCs
    tn = min(tn, n)                               #   stay double-buffered
    return int(tn), vmem_cap


# ---------------------------------------------------------------------------
# Wrapper (NCHW in / NCHW out, matching the PyTorch module)
# ---------------------------------------------------------------------------
def resize_pallas(x, scale_factor=1.0, mode="bilinear"):
    assert x.ndim == 4, "expected NCHW input"
    if float(scale_factor) == 1.0:
        return x                                   # identity, like torch

    B, C, H, W = x.shape
    h_out = int(math.floor(H * float(scale_factor)))   # torch output-size rule
    w_out = int(math.floor(W * float(scale_factor)))

    # bf16/f16 inputs -> native-precision MXU (f32 accumulate); f32 -> exact
    # parity with the PyTorch reference (f32 weights, f32 matmul).
    low_prec = x.dtype in (jnp.dtype(jnp.bfloat16), jnp.dtype(jnp.float16))
    wdt = x.dtype if low_prec else jnp.float32
    ah = jnp.asarray(_interp_matrix(H, h_out, scale_factor, mode), dtype=wdt)
    awt = jnp.asarray(_interp_matrix(W, w_out, scale_factor, mode).T, dtype=wdt)

    n = B * C
    xr = x.reshape(n, H, W)                        # free view, no transpose
    itemsize = jnp.dtype(x.dtype).itemsize
    tn, vmem_cap = _pick_images_per_block(n, H, W, h_out, w_out, itemsize)
    grid = (pl.cdiv(n, tn),)                       # ragged tail masked by Pallas

    flops = 2 * n * (H * W * w_out + h_out * H * w_out)
    bytes_accessed = (itemsize * n * (H * W + h_out * w_out)
                      + jnp.dtype(wdt).itemsize * (h_out * H + W * w_out))

    y = pl.pallas_call(
        _resize_kernel,
        out_shape=jax.ShapeDtypeStruct((n, h_out, w_out), x.dtype),
        grid=grid,
        in_specs=[
            pl.BlockSpec((tn, H, W), lambda b: (b, 0, 0)),
            pl.BlockSpec((h_out, H), lambda b: (0, 0)),
            pl.BlockSpec((W, w_out), lambda b: (0, 0)),
        ],
        out_specs=pl.BlockSpec((tn, h_out, w_out), lambda b: (b, 0, 0)),
        scratch_shapes=[pltpu.VMEM((tn, H, w_out), x.dtype)],
        compiler_params=pltpu.CompilerParams(
            dimension_semantics=("parallel",),
            vmem_limit_bytes=int(min(vmem_cap // 2, 64 << 20)),
        ),
        cost_estimate=pl.CostEstimate(
            flops=int(flops), transcendentals=0,
            bytes_accessed=int(bytes_accessed)),
    )(xr, ah, awt)
    return y.reshape(B, C, h_out, w_out)


class Resize:
    """Pallas port of the reference Resize module (non-learned path only)."""

    def __init__(self, in_channels=None, learned=False, mode="bilinear"):
        if learned:
            # The reference module also raises NotImplementedError for this path.
            raise NotImplementedError("learned resize is not implemented")
        self.mode = mode

    def __call__(self, x, scale_factor=1.0):
        return resize_pallas(x, scale_factor, mode=self.mode)


# ---------------------------------------------------------------------------
if __name__ == "__main__":
    key = jax.random.PRNGKey(0)
    B, C, H, W = 2, 4, 16, 16
    x = jax.random.normal(key, (B, C, H, W), dtype=jnp.float32)

    m = Resize(mode="bilinear")

    # scale_factor == 1.0 -> identity short-circuit (matches torch).
    y_id = m(x, scale_factor=1.0)
    assert y_id.shape == x.shape
    assert bool(jnp.all(y_id == x))

    # 2x bilinear upsample (align_corners=False).
    fwd2 = jax.jit(lambda a: m(a, scale_factor=2.0))
    y2 = fwd2(x)
    jax.block_until_ready(y2)
    assert y2.shape == (B, C, 2 * H, 2 * W), y2.shape
    assert bool(jnp.all(jnp.isfinite(y2)))
    ref2 = jax.image.resize(x, (B, C, 2 * H, 2 * W), method="bilinear")
    assert bool(jnp.allclose(y2, ref2, atol=1e-5, rtol=1e-5)), \
        float(jnp.max(jnp.abs(y2 - ref2)))

    # Non-integer scale factor: output size = floor(in * s), torch coordinate rule.
    fwd15 = jax.jit(lambda a: m(a, scale_factor=1.5))
    y15 = fwd15(x)
    jax.block_until_ready(y15)
    assert y15.shape == (B, C, 24, 24), y15.shape
    ref15 = jax.image.resize(x, (B, C, 24, 24), method="bilinear")
    assert bool(jnp.allclose(y15, ref15, atol=1e-5, rtol=1e-5)), \
        float(jnp.max(jnp.abs(y15 - ref15)))

    # bf16 path: native-precision MXU feed, f32 accumulation.
    xb = x.astype(jnp.bfloat16)
    yb = jax.jit(lambda a: m(a, scale_factor=2.0))(xb)
    jax.block_until_ready(yb)
    assert yb.shape == (B, C, 2 * H, 2 * W) and yb.dtype == jnp.bfloat16
    assert bool(jnp.allclose(yb.astype(jnp.float32), ref2, atol=3e-2, rtol=3e-2))

    print("KERNEL_OK")
</pallas_src>

<mosaic_0001>
module attributes {stable_mosaic.version = 11 : i64} {
  func.func @_resize_kernel(%arg0: i32, %arg1: memref<2x16x16xf32, #tpu.memory_space<vmem>>, %arg2: memref<32x16xf32, #tpu.memory_space<vmem>>, %arg3: memref<16x32xf32, #tpu.memory_space<vmem>>, %arg4: memref<2x32x32xf32, #tpu.memory_space<vmem>>, %arg5: memref<2x16x32xf32, #tpu.memory_space<vmem>>) attributes {dimension_semantics = [#tpu.dimension_semantics<parallel>], iteration_bounds = array<i64: 4>, scalar_prefetch = 0 : i64, scratch_operands = 1 : i64, tpu.core_type = #tpu.core_type<tc>, window_params = [{transform_indices = @transform_0, window_bounds = array<i64: 2, 16, 16>}, {pipeline_mode = #tpu.pipeline_mode<synchronous>, transform_indices = @transform_1, window_bounds = array<i64: 32, 16>}, {pipeline_mode = #tpu.pipeline_mode<synchronous>, transform_indices = @transform_2, window_bounds = array<i64: 16, 32>}, {transform_indices = @transform_3, window_bounds = array<i64: 2, 32, 32>}]} {
    %c0 = arith.constant 0 : index
    %c0_0 = arith.constant 0 : index
    %c0_1 = arith.constant 0 : index
    %0 = vector.load %arg1[%c0, %c0_0, %c0_1] : memref<2x16x16xf32, #tpu.memory_space<vmem>>, vector<2x16x16xf32>
    %1 = vector.shape_cast %0 : vector<2x16x16xf32> to vector<32x16xf32>
    %c0_2 = arith.constant 0 : index
    %c0_3 = arith.constant 0 : index
    %2 = vector.load %arg3[%c0_2, %c0_3] : memref<16x32xf32, #tpu.memory_space<vmem>>, vector<16x32xf32>
    %cst = arith.constant dense<0.000000e+00> : vector<32x32xf32>
    %3 = tpu.matmul %1, %2, %cst {dimension_numbers = #tpu.dot_dimension_numbers<[1], [0], [0], [1], [0, 0, 1, 1], [], []>} : vector<32x16xf32>, vector<16x32xf32>, vector<32x32xf32> -> vector<32x32xf32>
    %4 = vector.shape_cast %3 : vector<32x32xf32> to vector<2x16x32xf32>
    %c0_4 = arith.constant 0 : index
    %c0_5 = arith.constant 0 : index
    %c0_6 = arith.constant 0 : index
    %5 = vector.load %arg5[%c0_4, %c0_5, %c0_6] : memref<2x16x32xf32, #tpu.memory_space<vmem>>, vector<2x16x32xf32>
    tpu.vector_store %arg5[%c0_4, %c0_5, %c0_6], %4 {strides = array<i32>} : memref<2x16x32xf32, #tpu.memory_space<vmem>>, vector<2x16x32xf32>,
    %c0_7 = arith.constant 0 : index
    %c0_8 = arith.constant 0 : index
    %6 = vector.load %arg2[%c0_7, %c0_8] : memref<32x16xf32, #tpu.memory_space<vmem>>, vector<32x16xf32>
    %c0_i32 = arith.constant 0 : i32
    %7 = arith.index_cast %c0_i32 : i32 to index
    %c0_9 = arith.constant 0 : index
    %c0_10 = arith.constant 0 : index
    %8 = vector.load %arg5[%7, %c0_9, %c0_10] : memref<2x16x32xf32, #tpu.memory_space<vmem>>, vector<1x16x32xf32>
    %9 = vector.shape_cast %8 : vector<1x16x32xf32> to vector<16x32xf32>
    %cst_11 = arith.constant dense<0.000000e+00> : vector<32x32xf32>
    %10 = tpu.matmul %6, %9, %cst_11 {dimension_numbers = #tpu.dot_dimension_numbers<[1], [0], [0], [1], [0, 0, 1, 1], [], []>} : vector<32x16xf32>, vector<16x32xf32>, vector<32x32xf32> -> vector<32x32xf32>
    %11 = arith.index_cast %c0_i32 : i32 to index
    %c0_12 = arith.constant 0 : index
    %c0_13 = arith.constant 0 : index
    %12 = vector.load %arg4[%11, %c0_12, %c0_13] : memref<2x32x32xf32, #tpu.memory_space<vmem>>, vector<1x32x32xf32>
    %13 = vector.shape_cast %12 : vector<1x32x32xf32> to vector<32x32xf32>
    %14 = vector.shape_cast %10 : vector<32x32xf32> to vector<1x32x32xf32>
    tpu.vector_store %arg4[%11, %c0_12, %c0_13], %14 {strides = array<i32>} : memref<2x32x32xf32, #tpu.memory_space<vmem>>, vector<1x32x32xf32>,
    %c1_i32 = arith.constant 1 : i32
    %15 = arith.index_cast %c1_i32 : i32 to index
    %c0_14 = arith.constant 0 : index
    %c0_15 = arith.constant 0 : index
    %16 = vector.load %arg5[%15, %c0_14, %c0_15] : memref<2x16x32xf32, #tpu.memory_space<vmem>>, vector<1x16x32xf32>
    %17 = vector.shape_cast %16 : vector<1x16x32xf32> to vector<16x32xf32>
    %cst_16 = arith.constant dense<0.000000e+00> : vector<32x32xf32>
    %18 = tpu.matmul %6, %17, %cst_16 {dimension_numbers = #tpu.dot_dimension_numbers<[1], [0], [0], [1], [0, 0, 1, 1], [], []>} : vector<32x16xf32>, vector<16x32xf32>, vector<32x32xf32> -> vector<32x32xf32>
    %19 = arith.index_cast %c1_i32 : i32 to index
    %c0_17 = arith.constant 0 : index
    %c0_18 = arith.constant 0 : index
    %20 = vector.load %arg4[%19, %c0_17, %c0_18] : memref<2x32x32xf32, #tpu.memory_space<vmem>>, vector<1x32x32xf32>
    %21 = vector.shape_cast %20 : vector<1x32x32xf32> to vector<32x32xf32>
    %22 = vector.shape_cast %18 : vector<32x32xf32> to vector<1x32x32xf32>
    tpu.vector_store %arg4[%19, %c0_17, %c0_18], %22 {strides = array<i32>} : memref<2x32x32xf32, #tpu.memory_space<vmem>>, vector<1x32x32xf32>,
    %c2_i32 = arith.constant 2 : i32
    return
  }
  func.func @transform_0(%arg0: i32) -> (i32, i32, i32) {
    %c0_i32 = arith.constant 0 : i32
    %c0_i32_0 = arith.constant 0 : i32
    %c0_i32_1 = arith.constant 0 : i32
    return %arg0, %c0_i32, %c0_i32_0 : i32, i32, i32
  }
  func.func @transform_1(%arg0: i32) -> (i32, i32) {
    %c0_i32 = arith.constant 0 : i32
    %c0_i32_0 = arith.constant 0 : i32
    %c0_i32_1 = arith.constant 0 : i32
    return %c0_i32, %c0_i32_0 : i32, i32
  }
  func.func @transform_2(%arg0: i32) -> (i32, i32) {
    %c0_i32 = arith.constant 0 : i32
    %c0_i32_0 = arith.constant 0 : i32
    %c0_i32_1 = arith.constant 0 : i32
    return %c0_i32, %c0_i32_0 : i32, i32
  }
  func.func @transform_3(%arg0: i32) -> (i32, i32, i32) {
    %c0_i32 = arith.constant 0 : i32
    %c0_i32_0 = arith.constant 0 : i32
    %c0_i32_1 = arith.constant 0 : i32
    return %arg0, %c0_i32, %c0_i32_0 : i32, i32, i32
  }
}

</mosaic_0001>

<llo_original>
// kernel: _lambda_.1
$region0: #{_lambda_.1}
  #allocation0 [shape = 'u32[]', space=smem, size = 0x4, offset = 0x4, fixed_abs, tag = 'smem constant byte address 0x4 - core index']
  #allocation1 [shape = 'u32[144,128]{1,0:T(1,128)}', space=vmem, size = 0x12000, scoped, tag = 'internal scratch']
  #allocation2 [shape = 'f32[2,16,32]{2,1,0:T(8,128)}', space=vmem, size = 0x4000, scoped, tag = 'scratch operand']
  %s0 = inlined_call_operand.hbm [shape: f32[8,16,16], index: 0, kind: input, shape index: {}]
  %s1 = inlined_call_operand.hbm [shape: f32[32,16], index: 1, kind: input, shape index: {}]
  %s2 = inlined_call_operand.hbm [shape: f32[16,32], index: 2, kind: input, shape index: {}]
  %s3 = inlined_call_operand.hbm [shape: f32[8,32,32], index: 3, kind: output, shape index: {}]
  %s4 = sld [smem:[#allocation0]]
  $region57: #{_lambda_.1} parent=0
    _
  %s6 = ssub.s32 1, %s4
  %s7 = scalar_select 0, %s6, %s4
  $region1: #{_lambda_.1} parent=0
    #allocation3 [shape = 'u8[32768]{0}', space=vmem, size = 0x8000, scoped, tag = 'input window, operand 0']
    #allocation4 [shape = 's32[2]{0}', space=sflag, size = 0x8, scoped, tag = 'scoped memory for _lambda_.1']
    #allocation5 [shape = 's32[2]{0}', space=sflag, size = 0x8, scoped, tag = 'scoped memory for _lambda_.1']
    #allocation6 [shape = 'u8[16384]{0}', space=vmem, size = 0x4000, scoped, tag = 'input window, operand 1, single buffered']
    #allocation7 [shape = 's32[1]{0}', space=sflag, size = 0x4, scoped, tag = 'scoped memory for _lambda_.1']
    #allocation8 [shape = 'u8[8192]{0}', space=vmem, size = 0x2000, scoped, tag = 'input window, operand 2, single buffered']
    #allocation9 [shape = 'u8[65536]{0}', space=vmem, size = 0x10000, scoped, tag = 'output window, operand 0']
    %8 = vsyncpa [#allocation4], 0
    %s9 = scalar_lea.sflag [#allocation4], 1
    %10 = vsyncpa %s9, 0
    %11 = vsyncpa [#allocation7], 0
    %12 = vsyncpa [#allocation5], 0
    %s13 = scalar_lea.sflag [#allocation5], 1
    %14 = vsyncpa %s13, 0
    loop: start=0, step=1, limit=6
    $region2: #{_lambda_.1} parent=1 // loop_pre_header
      _
    $region3: #{_lambda_.1} parent=1 // loop_header
      %s16 = sphi 0, %s20
      %p17 = scmp.ge.s32.totalorder %s16, 6
      %s26 = sphi 0, %s28
      %s29 = sphi 0, %s26
      %s30 = sphi 0, %s29
      %s46 = sphi 0, %s30
      %s50 = sphi 0, %s50
      %s52 = sphi 0, %s50
      %s53 = sphi 0, %s52
      %s67 = sphi 0, %s53
      %s71 = sphi 0, %s71
      %s73 = sphi 0, %s71
      %s74 = sphi 0, %s73
      %s88 = sphi 0, %s74
      %s94 = sphi 0, %s96
      %s97 = sphi 0, %s94
      %s98 = sphi 0, %s97
      %s114 = sphi 0, %s98
    $region4: #{_lambda_.1} parent=1 // loop_header_branch
      %19 = sbr.rel (%p17) target = $region8
    $region5: #{_lambda_.1} parent=1 // loop_body
      %s21 = ssub.s32 %s16, 1
      %s22 = ssub.s32 %s16, 2
      %s23 = sadd.s32 %s16, 1
      %s24 = ssub.s32 %s16, %s23
      %p25 = scmp.eq.s32.totalorder %s24, 0
      %s27 = sadd.s32 %s26, 1
      %s28 = scalar_select %p25, %s26, %s27
      %p31 = pneg %p25
      %p32 = scmp.eq.s32.totalorder %s16, 3
      %p33 = por %p31, %p32
      %p34 = scmp.ne.s32.totalorder %s26, %s29
      %p35 = scmp.eq.s32.totalorder %s16, 0
      %p36 = por %p34, %p35
      %p37 = scmp.ne.s32.totalorder %s26, %s29
      %p38 = scmp.eq.s32.totalorder %s21, 3
      %p39 = por %p37, %p38
      %p40 = scmp.ne.s32.totalorder %s29, %s30
      %p41 = scmp.eq.s32.totalorder %s21, 0
      %p42 = por %p40, %p41
      %p43 = scmp.ne.s32.totalorder %s29, %s30
      %p44 = scmp.eq.s32.totalorder %s22, 3
      %p45 = por %p43, %p44
      %p47 = scmp.ne.s32.totalorder %s30, %s46
      %p48 = scmp.eq.s32.totalorder %s22, 0
      %p49 = por %p47, %p48
      %s51 = sadd.s32 %s50, 1
      %p54 = scmp.eq.s32.totalorder %s16, 3
      %p55 = scmp.ne.s32.totalorder %s50, %s52
      %p56 = scmp.eq.s32.totalorder %s16, 0
      %p57 = por %p55, %p56
      %p58 = scmp.ne.s32.totalorder %s50, %s52
      %p59 = scmp.eq.s32.totalorder %s21, 3
      %p60 = por %p58, %p59
      %p61 = scmp.ne.s32.totalorder %s52, %s53
      %p62 = scmp.eq.s32.totalorder %s21, 0
      %p63 = por %p61, %p62
      %p64 = scmp.ne.s32.totalorder %s52, %s53
      %p65 = scmp.eq.s32.totalorder %s22, 3
      %p66 = por %p64, %p65
      %p68 = scmp.ne.s32.totalorder %s53, %s67
      %p69 = scmp.eq.s32.totalorder %s22, 0
      %p70 = por %p68, %p69
      %s72 = sadd.s32 %s71, 1
      %p75 = scmp.eq.s32.totalorder %s16, 3
      %p76 = scmp.ne.s32.totalorder %s71, %s73
      %p77 = scmp.eq.s32.totalorder %s16, 0
      %p78 = por %p76, %p77
      %p79 = scmp.ne.s32.totalorder %s71, %s73
      %p80 = scmp.eq.s32.totalorder %s21, 3
      %p81 = por %p79, %p80
      %p82 = scmp.ne.s32.totalorder %s73, %s74
      %p83 = scmp.eq.s32.totalorder %s21, 0
      %p84 = por %p82, %p83
      %p85 = scmp.ne.s32.totalorder %s73, %s74
      %p86 = scmp.eq.s32.totalorder %s22, 3
      %p87 = por %p85, %p86
      %p89 = scmp.ne.s32.totalorder %s74, %s88
      %p90 = scmp.eq.s32.totalorder %s22, 0
      %p91 = por %p89, %p90
      %s92 = ssub.s32 %s16, %s23
      %p93 = scmp.eq.s32.totalorder %s92, 0
      %s95 = sadd.s32 %s94, 1
      %s96 = scalar_select %p93, %s94, %s95
      %p99 = pneg %p93
      %p100 = scmp.eq.s32.totalorder %s16, 3
      %p101 = por %p99, %p100
      %p102 = scmp.ne.s32.totalorder %s94, %s97
      %p103 = scmp.eq.s32.totalorder %s16, 0
      %p104 = por %p102, %p103
      %p105 = scmp.ne.s32.totalorder %s94, %s97
      %p106 = scmp.eq.s32.totalorder %s21, 3
      %p107 = por %p105, %p106
      %p108 = scmp.ne.s32.totalorder %s97, %s98
      %p109 = scmp.eq.s32.totalorder %s21, 0
      %p110 = por %p108, %p109
      %p111 = scmp.ne.s32.totalorder %s97, %s98
      %p112 = scmp.eq.s32.totalorder %s22, 3
      %p113 = por %p111, %p112
      %p115 = scmp.ne.s32.totalorder %s98, %s114
      %p116 = scmp.eq.s32.totalorder %s22, 0
      %p117 = por %p115, %p116
      %p118 = scmp.le.s32.totalorder 1, %s16
      %p119 = scmp.lt.s32.totalorder %s16, 5
      %p120 = pnand %p118, %p119
      %p121 = pneg %p120
      // Predicated region
      $region9: #{_lambda_.1} parent=5 // pred_check
        _
      $region10: #{_lambda_.1} parent=5 // pred_check_branch
        %123 = sbr.rel (%p120) target = $region12
      $region11: #{_lambda_.1} parent=5 // pred_region
        %s124 = ssub.s32 %s16, 1
        // Predicated region
        $region13: #{_lambda_.1} parent=11 // pred_check
          %p125 = pneg %p63
        $region14: #{_lambda_.1} parent=11 // pred_check_branch
          %127 = sbr.rel (%p125) target = $region16
        $region15: #{_lambda_.1} parent=11 // pred_region
          %s129 = ssub.s32 512, 512
          %130 = vsyncadd [#allocation7], %s129
          %s131 = sshll.u32 [#allocation6], 4
          %s132 = int_to_ptr.vmem [resolvable:$true] %s131
          %137 = dma.hbm_to_vmem [thread:$0]  %s1, 512, %s132, [#allocation7], 128, 128, 8
        $region16: #{_lambda_.1} parent=11 // pred_fallthru
          _
        // Predicated region
        $region17: #{_lambda_.1} parent=11 // pred_check
          %p138 = pneg %p84
        $region18: #{_lambda_.1} parent=11 // pred_check_branch
          %140 = sbr.rel (%p138) target = $region20
        $region19: #{_lambda_.1} parent=11 // pred_region
          %s142 = ssub.s32 256, 256
          %143 = vsyncadd [#allocation7], %s142
          %s144 = sshll.u32 [#allocation8], 4
          %s145 = int_to_ptr.vmem [resolvable:$true] %s144
          %150 = dma.hbm_to_vmem [thread:$0]  %s2, 256, %s145, [#allocation7], 128, 128, 8
        $region20: #{_lambda_.1} parent=11 // pred_fallthru
          _
      $region12: #{_lambda_.1} parent=5 // pred_fallthru
        _
      %p151 = scmp.lt.s32.totalorder %s16, 4
      // Predicated region
      $region21: #{_lambda_.1} parent=5 // pred_check
        %p152 = pneg %p151
      $region22: #{_lambda_.1} parent=5 // pred_check_branch
        %154 = sbr.rel (%p152) target = $region24
      $region23: #{_lambda_.1} parent=5 // pred_region
        // Predicated region
        $region25: #{_lambda_.1} parent=23 // pred_check
          %p155 = pneg %p36
        $region26: #{_lambda_.1} parent=23 // pred_check_branch
          %157 = sbr.rel (%p155) target = $region28
        $region27: #{_lambda_.1} parent=23 // pred_region
          %s158 = sand.u32 %s26, 1
          %s159 = scalar_lea.sflag [#allocation4], %s158
          %s160 = sand.u32 %s26, 1
          %s161 = smul.addr %s160, 32
          %s162 = scalar_lea.vmem [#allocation3], %s161
          %s163 = smul.u32 2, %s16
          %s165 = ssub.s32 512, 512
          %166 = vsyncadd %s159, %s165
          %s167 = smul.addr %s163, 2
          %s168 = smul.addr %s167, 128
          %s169 = scalar_lea.hbm %s0, %s168
          %s170 = sshll.u32 %s162, 4
          %s171 = int_to_ptr.vmem [resolvable:$true] %s170
          %176 = dma.hbm_to_vmem [thread:$0]  %s169, 512, %s171, %s159, 128, 128, 8
        $region28: #{_lambda_.1} parent=23 // pred_fallthru
          _
      $region24: #{_lambda_.1} parent=5 // pred_fallthru
        _
      %p177 = scmp.le.s32.totalorder 1, %s16
      %p178 = scmp.lt.s32.totalorder %s16, 5
      %p179 = pnand %p177, %p178
      %p180 = pneg %p179
      // Predicated region
      $region29: #{_lambda_.1} parent=5 // pred_check
        _
      $region30: #{_lambda_.1} parent=5 // pred_check_branch
        %182 = sbr.rel (%p179) target = $region32
      $region31: #{_lambda_.1} parent=5 // pred_region
        %s183 = ssub.s32 %s16, 1
        %s184 = sand.u32 %s29, 1
        %s185 = scalar_lea.sflag [#allocation4], %s184
        %s186 = sand.u32 %s29, 1
        %s187 = smul.addr %s186, 32
        %s188 = scalar_lea.vmem [#allocation3], %s187
        // Predicated region
        $region33: #{_lambda_.1} parent=31 // pred_check
          %p189 = pneg %p42
        $region34: #{_lambda_.1} parent=31 // pred_check_branch
          %191 = sbr.rel (%p189) target = $region36
        $region35: #{_lambda_.1} parent=31 // pred_region
          %192 = dma.done %s185, 512
        $region36: #{_lambda_.1} parent=31 // pred_fallthru
          _
        // Predicated region
        $region37: #{_lambda_.1} parent=31 // pred_check
          %p193 = pneg %p63
        $region38: #{_lambda_.1} parent=31 // pred_check_branch
          %195 = sbr.rel (%p193) target = $region40
        $region39: #{_lambda_.1} parent=31 // pred_region
          %196 = dma.done [#allocation7], 512
        $region40: #{_lambda_.1} parent=31 // pred_fallthru
          _
        // Predicated region
        $region41: #{_lambda_.1} parent=31 // pred_check
          %p197 = pneg %p84
        $region42: #{_lambda_.1} parent=31 // pred_check_branch
          %199 = sbr.rel (%p197) target = $region44
        $region43: #{_lambda_.1} parent=31 // pred_region
          %200 = dma.done [#allocation7], 256
        $region44: #{_lambda_.1} parent=31 // pred_fallthru
          _
        %s201 = sand.u32 %s29, 1
        %s202 = scalar_lea.sflag [#allocation4], %s201
        %s203 = sand.u32 %s29, 1
        %s204 = smul.addr %s203, 32
        %s205 = scalar_lea.vmem [#allocation3], %s204
        %p206 = pneg %p42
        %p207 = pneg %p39
        %p208 = pneg %p63
        %p209 = pneg %p60
        %p210 = pneg %p84
        %p211 = pneg %p81
        %p212 = pneg %p110
        %p213 = pneg %p107
        %s214 = sand.u32 %s97, 1
        %s215 = scalar_lea.sflag [#allocation5], %s214
        %s216 = sand.u32 %s97, 1
        %s217 = smul.addr %s216, 64
        %s218 = scalar_lea.vmem [#allocation9], %s217
        %s219 = smul.u32 2, %s21
        %s220 = smul.u32 2, %s21
        %v221 = vld [vmem:[%s188] sm:$0xff]
        %v222 = vld [vmem:[%s188 + $0x8] sm:$0xff]
        %v223 = vld [vmem:[%s188 + $0x10] sm:$0xff]
        %v224 = vld [vmem:[%s188 + $0x18] sm:$0xff]
        %v225 = vld [vmem:[#allocation8] sm:$0xff]
        %v226 = vld [vmem:[#allocation8 + $0x8] sm:$0xff]
        %vm227 = vcmask 130048
        %v229 = vsel %vm227, %v221, 0
        %v232 = vsel %vm227, %v222, 0
        %v235 = vsel %vm227, %v223, 0
        %v238 = vsel %vm227, %v224, 0
        %240 = vmatprep.subr.mxu0 0.0
        %241 = vmatpush1.msra.mxu0 %v225
        %242 = vmatprep.subr.mxu0 0.0
        %243 = vmatpush1.msra.mxu0 %v226
        %244 = vmatprep.subr.mxu0 0.0
        %245 = vmatpush1.msra.mxu0 0.0
        %246 = vmatprep.subr.mxu0 0.0
        %247 = vmatpush1.msra.mxu0 0.0
        %248 = vmatprep.subr.mxu0 0.0
        %249 = vmatpush1.msra.mxu0 0.0
        %250 = vmatprep.subr.mxu0 0.0
        %251 = vmatpush1.msra.mxu0 0.0
        %252 = vmatprep.subr.mxu0 0.0
        %253 = vmatpush1.msra.mxu0 0.0
        %254 = vmatprep.subr.mxu0 0.0
        %255 = vmatpush1.msra.mxu0 0.0
        %256 = vmatprep.subr.mxu0 0.0
        %257 = vmatpush1.msra.mxu0 0.0
        %258 = vmatprep.subr.mxu0 0.0
        %259 = vmatpush1.msra.mxu0 0.0
        %260 = vmatprep.subr.mxu0 0.0
        %261 = vmatpush1.msra.mxu0 0.0
        %262 = vmatprep.subr.mxu0 0.0
        %263 = vmatpush1.msra.mxu0 0.0
        %264 = vmatprep.subr.mxu0 0.0
        %265 = vmatpush1.msra.mxu0 0.0
        %266 = vmatprep.subr.mxu0 0.0
        %267 = vmatpush1.msra.mxu0 0.0
        %268 = vmatprep.subr.mxu0 0.0
        %269 = vmatpush1.msra.mxu0 0.0
        %270 = vmatprep.subr.mxu0 0.0
        %271 = vmatpush1.msra.mxu0 0.0
        %272 = vmatprep.subr.mxu0 0.0
        %273 = vmatpush1.msra.mxu0 0.0
        %274 = vmatprep.subr.mxu0 0.0
        %275 = vmatpush1.msra.mxu0 0.0
        %276 = vmatprep.subr.mxu0 0.0
        %277 = vmatpush1.msra.mxu0 0.0
        %278 = vmatprep.subr.mxu0 0.0
        %279 = vmatpush1.msra.mxu0 0.0
        %280 = vmatprep.subr.mxu0 0.0
        %281 = vmatpush1.msra.mxu0 0.0
        %282 = vmatprep.subr.mxu0 0.0
        %283 = vmatpush1.msra.mxu0 0.0
        %284 = vmatprep.subr.mxu0 0.0
        %285 = vmatpush1.msra.mxu0 0.0
        %286 = vmatprep.subr.mxu0 0.0
        %287 = vmatpush1.msra.mxu0 0.0
        %288 = vmatprep.subr.mxu0 0.0
        %289 = vmatpush1.msra.mxu0 0.0
        %290 = vmatprep.subr.mxu0 0.0
        %291 = vmatpush1.msra.mxu0 0.0
        %292 = vmatprep.subr.mxu0 0.0
        %293 = vmatpush1.msra.mxu0 0.0
        %294 = vmatprep.subr.mxu0 0.0
        %295 = vmatpush1.msra.mxu0 0.0
        %296 = vmatprep.subr.mxu0 0.0
        %297 = vmatpush1.msra.mxu0 0.0
        %298 = vmatprep.subr.mxu0 0.0
        %299 = vmatpush1.msra.mxu0 0.0
        %300 = vmatprep.subr.mxu0 0.0
        %301 = vmatpush1.msra.mxu0 0.0
        %302 = vmatprep.subr.mxu0 0.0
        %303 = vmatpush1.msra.mxu0 0.0
        %304 = vmatprep.mubr.f32.mxu0 0.0
        %305 = vmatmul.mubr.f32.gmra.mrb[0].mxu0 %v229
        %v306 = vpop.f32.mrb[0].mxu0
        %v307 = vadd.f32 0.0, %v306
        %v308 = vpop.f32.mrb[0].mxu0
        %309 = vmatprep.mubr.f32.mxu0 0.0
        %310 = vmatmul.mubr.f32.gmra.mrb[0].mxu0 %v232
        %v311 = vpop.f32.mrb[0].mxu0
        %v312 = vadd.f32 0.0, %v311
        %v313 = vpop.f32.mrb[0].mxu0
        %314 = vmatprep.mubr.f32.mxu0 0.0
        %315 = vmatmul.mubr.f32.gmra.mrb[0].mxu0 %v235
        %v316 = vpop.f32.mrb[0].mxu0
        %v317 = vadd.f32 0.0, %v316
        %v318 = vpop.f32.mrb[0].mxu0
        %319 = vmatprep.mubr.f32.mxu0 0.0
        %320 = vmatmul.mubr.f32.gmra.mrb[0].mxu0 %v238
        %v321 = vpop.f32.mrb[0].mxu0
        %v322 = vadd.f32 0.0, %v321
        %v323 = vpop.f32.mrb[0].mxu0
        %324 = vdwg.mxu0
        %vm325 = vcmask 261120
        %326 = vst.msk [vmem:[#allocation2] sm:$0xff] %vm325, %v307
        %327 = vst.msk [vmem:[#allocation2 + $0x8] sm:$0xff] %vm325, %v312
        %328 = vst.msk [vmem:[#allocation2 + $0x10] sm:$0xff] %vm325, %v317
        %329 = vst.msk [vmem:[#allocation2 + $0x18] sm:$0xff] %vm325, %v322
        %v330 = vld [vmem:[#allocation6] sm:$0xff]
        %v331 = vld [vmem:[#allocation6 + $0x8] sm:$0xff]
        %v332 = vld [vmem:[#allocation6 + $0x10] sm:$0xff]
        %v333 = vld [vmem:[#allocation6 + $0x18] sm:$0xff]
        %v334 = vld [vmem:[#allocation2] sm:$0xff]
        %v335 = vld [vmem:[#allocation2 + $0x8] sm:$0xff]
        %v337 = vsel %vm227, %v330, 0
        %v340 = vsel %vm227, %v331, 0
        %v343 = vsel %vm227, %v332, 0
        %v346 = vsel %vm227, %v333, 0
        %348 = vmatprep.subr.mxu0 0.0
        %349 = vmatpush1.msra.mxu0 %v334
        %350 = vmatprep.subr.mxu0 0.0
        %351 = vmatpush1.msra.mxu0 %v335
        %352 = vmatprep.subr.mxu0 0.0
        %353 = vmatpush1.msra.mxu0 0.0
        %354 = vmatprep.subr.mxu0 0.0
        %355 = vmatpush1.msra.mxu0 0.0
        %356 = vmatprep.subr.mxu0 0.0
        %357 = vmatpush1.msra.mxu0 0.0
        %358 = vmatprep.subr.mxu0 0.0
        %359 = vmatpush1.msra.mxu0 0.0
        %360 = vmatprep.subr.mxu0 0.0
        %361 = vmatpush1.msra.mxu0 0.0
        %362 = vmatprep.subr.mxu0 0.0
        %363 = vmatpush1.msra.mxu0 0.0
        %364 = vmatprep.subr.mxu0 0.0
        %365 = vmatpush1.msra.mxu0 0.0
        %366 = vmatprep.subr.mxu0 0.0
        %367 = vmatpush1.msra.mxu0 0.0
        %368 = vmatprep.subr.mxu0 0.0
        %369 = vmatpush1.msra.mxu0 0.0
        %370 = vmatprep.subr.mxu0 0.0
        %371 = vmatpush1.msra.mxu0 0.0
        %372 = vmatprep.subr.mxu0 0.0
        %373 = vmatpush1.msra.mxu0 0.0
        %374 = vmatprep.subr.mxu0 0.0
        %375 = vmatpush1.msra.mxu0 0.0
        %376 = vmatprep.subr.mxu0 0.0
        %377 = vmatpush1.msra.mxu0 0.0
        %378 = vmatprep.subr.mxu0 0.0
        %379 = vmatpush1.msra.mxu0 0.0
        %380 = vmatprep.subr.mxu0 0.0
        %381 = vmatpush1.msra.mxu0 0.0
        %382 = vmatprep.subr.mxu0 0.0
        %383 = vmatpush1.msra.mxu0 0.0
        %384 = vmatprep.subr.mxu0 0.0
        %385 = vmatpush1.msra.mxu0 0.0
        %386 = vmatprep.subr.mxu0 0.0
        %387 = vmatpush1.msra.mxu0 0.0
        %388 = vmatprep.subr.mxu0 0.0
        %389 = vmatpush1.msra.mxu0 0.0
        %390 = vmatprep.subr.mxu0 0.0
        %391 = vmatpush1.msra.mxu0 0.0
        %392 = vmatprep.subr.mxu0 0.0
        %393 = vmatpush1.msra.mxu0 0.0
        %394 = vmatprep.subr.mxu0 0.0
        %395 = vmatpush1.msra.mxu0 0.0
        %396 = vmatprep.subr.mxu0 0.0
        %397 = vmatpush1.msra.mxu0 0.0
        %398 = vmatprep.subr.mxu0 0.0
        %399 = vmatpush1.msra.mxu0 0.0
        %400 = vmatprep.subr.mxu0 0.0
        %401 = vmatpush1.msra.mxu0 0.0
        %402 = vmatprep.subr.mxu0 0.0
        %403 = vmatpush1.msra.mxu0 0.0
        %404 = vmatprep.subr.mxu0 0.0
        %405 = vmatpush1.msra.mxu0 0.0
        %406 = vmatprep.subr.mxu0 0.0
        %407 = vmatpush1.msra.mxu0 0.0
        %408 = vmatprep.subr.mxu0 0.0
        %409 = vmatpush1.msra.mxu0 0.0
        %410 = vmatprep.subr.mxu0 0.0
        %411 = vmatpush1.msra.mxu0 0.0
        %412 = vmatprep.mubr.f32.mxu0 0.0
        %413 = vmatmul.mubr.f32.gmra.mrb[0].mxu0 %v337
        %v414 = vpop.f32.mrb[0].mxu0
        %v415 = vadd.f32 0.0, %v414
        %v416 = vpop.f32.mrb[0].mxu0
        %417 = vmatprep.mubr.f32.mxu0 0.0
        %418 = vmatmul.mubr.f32.gmra.mrb[0].mxu0 %v340
        %v419 = vpop.f32.mrb[0].mxu0
        %v420 = vadd.f32 0.0, %v419
        %v421 = vpop.f32.mrb[0].mxu0
        %422 = vmatprep.mubr.f32.mxu0 0.0
        %423 = vmatmul.mubr.f32.gmra.mrb[0].mxu0 %v343
        %v424 = vpop.f32.mrb[0].mxu0
        %v425 = vadd.f32 0.0, %v424
        %v426 = vpop.f32.mrb[0].mxu0
        %427 = vmatprep.mubr.f32.mxu0 0.0
        %428 = vmatmul.mubr.f32.gmra.mrb[0].mxu0 %v346
        %v429 = vpop.f32.mrb[0].mxu0
        %v430 = vadd.f32 0.0, %v429
        %v431 = vpop.f32.mrb[0].mxu0
        %432 = vdwg.mxu0
        %433 = vst.msk [vmem:[%s218] sm:$0xff] %vm325, %v415
        %434 = vst.msk [vmem:[%s218 + $0x8] sm:$0xff] %vm325, %v420
        %435 = vst.msk [vmem:[%s218 + $0x10] sm:$0xff] %vm325, %v425
        %436 = vst.msk [vmem:[%s218 + $0x18] sm:$0xff] %vm325, %v430
        %s437 = scalar_lea.vmem [#allocation2], 16
        %v438 = vld [vmem:[%s437] sm:$0xff]
        %v439 = vld [vmem:[%s437 + $0x8] sm:$0xff]
        %440 = vmatprep.subr.mxu0 0.0
        %441 = vmatpush1.msra.mxu0 %v438
        %442 = vmatprep.subr.mxu0 0.0
        %443 = vmatpush1.msra.mxu0 %v439
        %444 = vmatprep.subr.mxu0 0.0
        %445 = vmatpush1.msra.mxu0 0.0
        %446 = vmatprep.subr.mxu0 0.0
        %447 = vmatpush1.msra.mxu0 0.0
        %448 = vmatprep.subr.mxu0 0.0
        %449 = vmatpush1.msra.mxu0 0.0
        %450 = vmatprep.subr.mxu0 0.0
        %451 = vmatpush1.msra.mxu0 0.0
        %452 = vmatprep.subr.mxu0 0.0
        %453 = vmatpush1.msra.mxu0 0.0
        %454 = vmatprep.subr.mxu0 0.0
        %455 = vmatpush1.msra.mxu0 0.0
        %456 = vmatprep.subr.mxu0 0.0
        %457 = vmatpush1.msra.mxu0 0.0
        %458 = vmatprep.subr.mxu0 0.0
        %459 = vmatpush1.msra.mxu0 0.0
        %460 = vmatprep.subr.mxu0 0.0
        %461 = vmatpush1.msra.mxu0 0.0
        %462 = vmatprep.subr.mxu0 0.0
        %463 = vmatpush1.msra.mxu0 0.0
        %464 = vmatprep.subr.mxu0 0.0
        %465 = vmatpush1.msra.mxu0 0.0
        %466 = vmatprep.subr.mxu0 0.0
        %467 = vmatpush1.msra.mxu0 0.0
        %468 = vmatprep.subr.mxu0 0.0
        %469 = vmatpush1.msra.mxu0 0.0
        %470 = vmatprep.subr.mxu0 0.0
        %471 = vmatpush1.msra.mxu0 0.0
        %472 = vmatprep.subr.mxu0 0.0
        %473 = vmatpush1.msra.mxu0 0.0
        %474 = vmatprep.subr.mxu0 0.0
        %475 = vmatpush1.msra.mxu0 0.0
        %476 = vmatprep.subr.mxu0 0.0
        %477 = vmatpush1.msra.mxu0 0.0
        %478 = vmatprep.subr.mxu0 0.0
        %479 = vmatpush1.msra.mxu0 0.0
        %480 = vmatprep.subr.mxu0 0.0
        %481 = vmatpush1.msra.mxu0 0.0
        %482 = vmatprep.subr.mxu0 0.0
        %483 = vmatpush1.msra.mxu0 0.0
        %484 = vmatprep.subr.mxu0 0.0
        %485 = vmatpush1.msra.mxu0 0.0
        %486 = vmatprep.subr.mxu0 0.0
        %487 = vmatpush1.msra.mxu0 0.0
        %488 = vmatprep.subr.mxu0 0.0
        %489 = vmatpush1.msra.mxu0 0.0
        %490 = vmatprep.subr.mxu0 0.0
        %491 = vmatpush1.msra.mxu0 0.0
        %492 = vmatprep.subr.mxu0 0.0
        %493 = vmatpush1.msra.mxu0 0.0
        %494 = vmatprep.subr.mxu0 0.0
        %495 = vmatpush1.msra.mxu0 0.0
        %496 = vmatprep.subr.mxu0 0.0
        %497 = vmatpush1.msra.mxu0 0.0
        %498 = vmatprep.subr.mxu0 0.0
        %499 = vmatpush1.msra.mxu0 0.0
        %500 = vmatprep.subr.mxu0 0.0
        %501 = vmatpush1.msra.mxu0 0.0
        %502 = vmatprep.subr.mxu0 0.0
        %503 = vmatpush1.msra.mxu0 0.0
        %504 = vmatprep.mubr.f32.mxu0 0.0
        %505 = vmatmul.mubr.f32.gmra.mrb[0].mxu0 %v337
        %v506 = vpop.f32.mrb[0].mxu0
        %v507 = vadd.f32 0.0, %v506
        %v508 = vpop.f32.mrb[0].mxu0
        %509 = vmatprep.mubr.f32.mxu0 0.0
        %510 = vmatmul.mubr.f32.gmra.mrb[0].mxu0 %v340
        %v511 = vpop.f32.mrb[0].mxu0
        %v512 = vadd.f32 0.0, %v511
        %v513 = vpop.f32.mrb[0].mxu0
        %514 = vmatprep.mubr.f32.mxu0 0.0
        %515 = vmatmul.mubr.f32.gmra.mrb[0].mxu0 %v343
        %v516 = vpop.f32.mrb[0].mxu0
        %v517 = vadd.f32 0.0, %v516
        %v518 = vpop.f32.mrb[0].mxu0
        %519 = vmatprep.mubr.f32.mxu0 0.0
        %520 = vmatmul.mubr.f32.gmra.mrb[0].mxu0 %v346
        %v521 = vpop.f32.mrb[0].mxu0
        %v522 = vadd.f32 0.0, %v521
        %v523 = vpop.f32.mrb[0].mxu0
        %524 = vdwg.mxu0
        %s525 = scalar_lea.vmem %s218, 32 [#allocation9]
        %526 = vst.msk [vmem:[%s525] sm:$0xff] %vm325, %v507
        %527 = vst.msk [vmem:[%s525 + $0x8] sm:$0xff] %vm325, %v512
        %528 = vst.msk [vmem:[%s525 + $0x10] sm:$0xff] %vm325, %v517
        %529 = vst.msk [vmem:[%s525 + $0x18] sm:$0xff] %vm325, %v522
        %s530 = sand.u32 %s97, 1
        %s531 = scalar_lea.sflag [#allocation5], %s530
        %s532 = sand.u32 %s97, 1
        %s533 = smul.addr %s532, 64
        %s534 = scalar_lea.vmem [#allocation9], %s533
        // Predicated region
        $region45: #{_lambda_.1} parent=31 // pred_check
          %p535 = pneg %p107
        $region46: #{_lambda_.1} parent=31 // pred_check_branch
          %537 = sbr.rel (%p535) target = $region48
        $region47: #{_lambda_.1} parent=31 // pred_region
          %s538 = smul.u32 2, %s21
          %s540 = ssub.s32 1024, 1024
          %541 = vsyncadd %s531, %s540
          %s542 = smul.addr %s538, 4
          %s543 = smul.addr %s542, 128
          %s544 = scalar_lea.hbm %s3, %s543
          %s545 = sshll.u32 %s534, 4
          %s546 = int_to_ptr.vmem [resolvable:$true] %s545
          %551 = dma.vmem_to_hbm [thread:$0]  %s546, 1024, %s544, %s531, 128, 128, 8
        $region48: #{_lambda_.1} parent=31 // pred_fallthru
          _
      $region32: #{_lambda_.1} parent=5 // pred_fallthru
        _
      %p552 = scmp.le.s32.totalorder 2, %s16
      // Predicated region
      $region49: #{_lambda_.1} parent=5 // pred_check
        %p553 = pneg %p552
      $region50: #{_lambda_.1} parent=5 // pred_check_branch
        %555 = sbr.rel (%p553) target = $region52
      $region51: #{_lambda_.1} parent=5 // pred_region
        %s556 = ssub.s32 %s16, 2
        // Predicated region
        $region53: #{_lambda_.1} parent=51 // pred_check
          %p557 = pneg %p113
        $region54: #{_lambda_.1} parent=51 // pred_check_branch
          %559 = sbr.rel (%p557) target = $region56
        $region55: #{_lambda_.1} parent=51 // pred_region
          %s560 = sand.u32 %s98, 1
          %s561 = scalar_lea.sflag [#allocation5], %s560
          %s562 = sand.u32 %s98, 1
          %s563 = smul.addr %s562, 64
          %s564 = scalar_lea.vmem [#allocation9], %s563
          %565 = dma.done %s561, 1024
        $region56: #{_lambda_.1} parent=51 // pred_fallthru
          _
      $region52: #{_lambda_.1} parent=5 // pred_fallthru
        _
    $region6: #{_lambda_.1} parent=1 // loop_footer
      %s20 = sadd.s32 1, %s16
    $region7: #{_lambda_.1} parent=1 // loop_footer_branch
      %15 = sbr.rel target = $region3
    $region8: #{_lambda_.1} parent=1 // loop_exit
      _
    %566 = vsyncpa [#allocation4], 1
    %s567 = scalar_lea.sflag [#allocation4], 1
    %568 = vsyncpa %s567, 1
    %569 = vsyncpa [#allocation7], 1
    %570 = vsyncpa [#allocation5], 1
    %s571 = scalar_lea.sflag [#allocation5], 1
    %572 = vsyncpa %s571, 1

</llo_original>
